<compile_context>
chip_gen: v5e
topology: v5e:2x2
jax: 0.10.0
libtpu: 0.0.40
codegen_flags: <defaults>
</compile_context>

<pallas_src>
import jax
import jax.numpy as jnp
from jax.experimental import pallas as pl
from jax.experimental.pallas import tpu as pltpu


# ---------------------------------------------------------------------------
# Shared-range-reduction sin/cos (one reduction, two short polynomials).
# ---------------------------------------------------------------------------
_TWO_OVER_PI = 0.6366197723675814

# 3-term Cody-Waite split of pi/2.  The first two terms carry <= 11 significand
# bits, so q * term is exact in f32 for |q| < 2**13, i.e. |position * freq| up to
# ~1.2e4 (covers max_positions-scale diffusion timesteps; accuracy degrades
# gracefully beyond that).
_PIO2_A = 1.5703125                 # 7-bit significand
_PIO2_B = 4.8375129699707031e-4     # 11-bit significand
_PIO2_C = 7.549789954892e-8         # residual

# Cephes single-precision minimax coefficients on [-pi/4, pi/4].
_S1, _S2, _S3 = -1.6666654611e-1, 8.3321608736e-3, -1.9515295891e-4
_C1, _C2, _C3 = 4.166664568298827e-2, -1.388731625493765e-3, 2.443315711809948e-5


def _cos_sin(x):
    """Return (cos(x), sin(x)) for f32 `x` with a single shared range reduction.

    jnp.cos / jnp.sin each lower to their own range reduction + polynomial
    (VALU, not EUP); sharing the reduction and evaluating both short polynomials
    on the same reduced argument roughly halves the dominant VALU cost.
    """
    q = jnp.floor(x * _TWO_OVER_PI + 0.5)          # nearest multiple of pi/2
    k = q.astype(jnp.int32)
    r = x - q * _PIO2_A
    r = r - q * _PIO2_B
    r = r - q * _PIO2_C                            # r in ~[-pi/4, pi/4]
    z = r * r
    sin_r = r + r * z * (_S1 + z * (_S2 + z * _S3))
    cos_r = 1.0 - 0.5 * z + z * z * (_C1 + z * (_C2 + z * _C3))
    swap = (k & 1) == 1                            # odd quadrant: swap sin/cos
    sin_v = jnp.where(swap, cos_r, sin_r)
    cos_v = jnp.where(swap, sin_r, cos_r)
    sin_v = jnp.where((k & 2) == 2, -sin_v, sin_v)
    cos_v = jnp.where(((k + 1) & 2) == 2, -cos_v, cos_v)
    return cos_v, sin_v


def _make_kernel(half, split_store):
    def kernel(x_ref, f_ref, out_ref):
        # x_ref: (TILE_N, 1) f32 positions; f_ref: (1, half) f32 freqs (resident).
        prod = x_ref[...] * f_ref[...]             # outer product -> (TILE_N, half)
        cos_v, sin_v = _cos_sin(prod)
        if split_store:
            # half is a multiple of 128: both slice stores are lane-aligned.
            out_ref[:, :half] = cos_v.astype(out_ref.dtype)
            out_ref[:, half:] = sin_v.astype(out_ref.dtype)
        else:
            # Misaligned half boundary: assemble the full row in vregs and issue
            # one dense (TILE_N, C) store instead of two masked partial stores
            # (v5e has a single vector-store slot per bundle).
            out_ref[...] = jnp.concatenate([cos_v, sin_v], axis=1).astype(out_ref.dtype)

    return kernel


# ---------------------------------------------------------------------------
# Wrapper: tiling, padding, pallas_call.
# ---------------------------------------------------------------------------
def _round_up(a, b):
    return (a + b - 1) // b * b


def _cdiv(a, b):
    return -(-a // b)


def _choose_tiling(n, num_channels, tile_n):
    """Pick (tile_rows, num_steps, padded_rows) with < 8 wasted rows per step."""
    n8 = _round_up(max(n, 1), 8)
    # VMEM budget: keep one (tn, C) f32 output tile at <= ~2 MiB so the
    # double-buffered output + lane-padded x tile + f32 temporaries stay far
    # below v7x's 64 MiB physical VMEM and v5e's default scoped limit.
    budget_rows = max(8, ((2 * 1024 * 1024) // (4 * num_channels)) // 8 * 8)
    tn_cap = min(_round_up(max(int(tile_n), 8), 8), budget_rows)

    num_steps = _cdiv(n8, tn_cap)
    # v7x has 2 TensorCores; for large inputs make sure the "parallel" row axis
    # has >= 4 steps so both cores get work (harmless on single-TC v5e/v6e; small
    # inputs keep a 1-step grid to avoid the ~0.35 us/step overhead).
    if n8 >= 2048:
        num_steps = max(num_steps, 4)
    num_steps = max(1, min(num_steps, n8 // 8))
    # Padding-minimizing tile: waste is < 8 rows per step instead of up to
    # tile_n-1 rows total when padding N up to a fixed tile size.
    tn = _round_up(_cdiv(n8, num_steps), 8)
    return tn, num_steps, tn * num_steps


def positional_embedding(x, num_channels, max_positions=10000, endpoint=False,
                         tile_n=1024):
    """x: (N,) array of positions. Returns (N, num_channels) in a floating dtype."""
    assert x.ndim == 1, "PositionalEmbedding expects a 1-D tensor of positions"
    assert num_channels >= 2 and num_channels % 2 == 0, "num_channels must be even"
    n = x.shape[0]
    half = num_channels // 2
    # Diffusion timesteps may be integer; the cos/sin embedding must stay floating
    # (PyTorch promotes through the float freqs / trig ops).
    out_dtype = x.dtype if jnp.issubdtype(x.dtype, jnp.floating) else jnp.float32

    # Frequencies (plain JAX glue) — same math as the torch forward, always f32.
    denom = max(half - (1 if endpoint else 0), 1)
    freqs = jnp.arange(half, dtype=jnp.float32) / float(denom)
    freqs = (1.0 / float(max_positions)) ** freqs

    tn, num_steps, n_pad = _choose_tiling(n, num_channels, tile_n)

    xf = x.astype(jnp.float32)
    if n_pad != n:
        xf = jnp.pad(xf, (0, n_pad - n))
    # NOTE: the (tn, 1) position block is lane-padded to 128 in VMEM (tn*512 B per
    # buffer); with the VMEM-budgeted tn this stays <= ~0.5 MiB, so keep the simple
    # layout instead of a lane-major (8, tn/8) block.
    x2d = xf.reshape(n_pad, 1)
    f2d = freqs.reshape(1, half)

    kernel = _make_kernel(half, split_store=(half % 128 == 0))

    out = pl.pallas_call(
        kernel,
        out_shape=jax.ShapeDtypeStruct((n_pad, num_channels), out_dtype),
        grid=(num_steps,),
        in_specs=[
            # (TILE_N, 1) position tile for grid step i.
            pl.BlockSpec((tn, 1), lambda i: (i, 0)),
            # freqs: constant index_map -> DMA'd once, resident across all steps.
            pl.BlockSpec((1, half), lambda i: (0, 0)),
        ],
        out_specs=pl.BlockSpec((tn, num_channels), lambda i: (i, 0)),
        compiler_params=pltpu.CompilerParams(
            dimension_semantics=("parallel",),
            vmem_limit_bytes=32 * 1024 * 1024,
        ),
        cost_estimate=pl.CostEstimate(
            # ~40 VALU ops/element for the shared reduction + both polynomials.
            flops=40 * n_pad * half,
            transcendentals=0,
            bytes_accessed=4 * (n_pad + half)
            + jnp.dtype(out_dtype).itemsize * n_pad * num_channels,
        ),
    )(x2d, f2d)

    if n_pad != n:
        out = out[:n]
    return out
    # TODO(synk): at typical diffusion sizes (N of a few hundred) this op is
    # launch/HBM-writeback bound; fusing the embedding into the consuming MLP at
    # the call site removes the materialization entirely.


def _reference(x, num_channels, max_positions=10000, endpoint=False):
    half = num_channels // 2
    denom = max(half - (1 if endpoint else 0), 1)
    freqs = jnp.arange(half, dtype=jnp.float32) / float(denom)
    freqs = (1.0 / float(max_positions)) ** freqs
    outer = x.astype(jnp.float32)[:, None] * freqs[None, :]
    out = jnp.concatenate([jnp.cos(outer), jnp.sin(outer)], axis=1)
    out_dtype = x.dtype if jnp.issubdtype(x.dtype, jnp.floating) else jnp.float32
    return out.astype(out_dtype)


if __name__ == "__main__":
    key = jax.random.PRNGKey(0)

    # 1) Small demo consistent with the module's forward (diffusion timesteps).
    N, C = 8, 32
    x = jax.random.uniform(key, (N,), dtype=jnp.float32) * 1000.0
    out = jax.block_until_ready(positional_embedding(x, C))
    ref = _reference(x, C)
    assert out.shape == (N, C) and out.dtype == ref.dtype
    assert jnp.allclose(out, ref, atol=1e-5, rtol=1e-5)

    # 2) Multi-step grid + row padding + misaligned-half (concat-store) path.
    x2 = jax.random.uniform(jax.random.PRNGKey(1), (1000,), dtype=jnp.float32) * 1000.0
    out2 = jax.block_until_ready(positional_embedding(x2, 128, tile_n=256))
    assert out2.shape == (1000, 128)
    assert jnp.allclose(out2, _reference(x2, 128), atol=1e-5, rtol=1e-5)

    # 3) Lane-aligned split-store path (half % 128 == 0) + endpoint=True.
    x3 = jax.random.uniform(jax.random.PRNGKey(2), (40,), dtype=jnp.float32) * 1000.0
    out3 = jax.block_until_ready(positional_embedding(x3, 256, endpoint=True))
    assert jnp.allclose(out3, _reference(x3, 256, endpoint=True), atol=1e-5, rtol=1e-5)

    # 4) Integer timesteps must still produce a floating embedding.
    x4 = jnp.arange(8, dtype=jnp.int32) * 37
    out4 = jax.block_until_ready(positional_embedding(x4, 32))
    assert out4.dtype == jnp.float32
    assert jnp.allclose(out4, _reference(x4, 32), atol=1e-5, rtol=1e-5)

    print("KERNEL_OK")
</pallas_src>

<mosaic_0001>
module attributes {stable_mosaic.version = 11 : i64} {
  func.func @kernel(%arg0: i32, %arg1: memref<8x1xf32, #tpu.memory_space<vmem>>, %arg2: memref<1x16xf32, #tpu.memory_space<vmem>>, %arg3: memref<8x32xf32, #tpu.memory_space<vmem>>) attributes {dimension_semantics = [#tpu.dimension_semantics<parallel>], iteration_bounds = array<i64: 1>, scalar_prefetch = 0 : i64, scratch_operands = 0 : i64, tpu.core_type = #tpu.core_type<tc>, window_params = [{transform_indices = @transform_0, window_bounds = array<i64: 8, 1>}, {pipeline_mode = #tpu.pipeline_mode<synchronous>, transform_indices = @transform_1, window_bounds = array<i64: 1, 16>}, {transform_indices = @transform_2, window_bounds = array<i64: 8, 32>}]} {
    %c0 = arith.constant 0 : index
    %c0_0 = arith.constant 0 : index
    %0 = vector.load %arg1[%c0, %c0_0] : memref<8x1xf32, #tpu.memory_space<vmem>>, vector<8x1xf32>
    %c0_1 = arith.constant 0 : index
    %c0_2 = arith.constant 0 : index
    %1 = vector.load %arg2[%c0_1, %c0_2] : memref<1x16xf32, #tpu.memory_space<vmem>>, vector<1x16xf32>
    %2 = vector.broadcast %0 : vector<8x1xf32> to vector<8x16xf32>
    %3 = vector.broadcast %1 : vector<1x16xf32> to vector<8x16xf32>
    %4 = arith.mulf %2, %3 : vector<8x16xf32>
    %cst = arith.constant 0.636619746 : f32
    %5 = vector.broadcast %cst : f32 to vector<8x16xf32>
    %6 = arith.mulf %4, %5 : vector<8x16xf32>
    %cst_3 = arith.constant 5.000000e-01 : f32
    %7 = vector.broadcast %cst_3 : f32 to vector<8x16xf32>
    %8 = arith.addf %6, %7 : vector<8x16xf32>
    %9 = math.floor %8 : vector<8x16xf32>
    %10 = arith.fptosi %9 : vector<8x16xf32> to vector<8x16xi32>
    %cst_4 = arith.constant 1.5703125 : f32
    %11 = vector.broadcast %cst_4 : f32 to vector<8x16xf32>
    %12 = arith.mulf %9, %11 : vector<8x16xf32>
    %13 = arith.subf %4, %12 : vector<8x16xf32>
    %cst_5 = arith.constant 4.83751297E-4 : f32
    %14 = vector.broadcast %cst_5 : f32 to vector<8x16xf32>
    %15 = arith.mulf %9, %14 : vector<8x16xf32>
    %16 = arith.subf %13, %15 : vector<8x16xf32>
    %cst_6 = arith.constant 7.549790e-08 : f32
    %17 = vector.broadcast %cst_6 : f32 to vector<8x16xf32>
    %18 = arith.mulf %9, %17 : vector<8x16xf32>
    %19 = arith.subf %16, %18 : vector<8x16xf32>
    %20 = arith.mulf %19, %19 : vector<8x16xf32>
    %21 = arith.mulf %19, %20 : vector<8x16xf32>
    %cst_7 = arith.constant -1.95152956E-4 : f32
    %22 = vector.broadcast %cst_7 : f32 to vector<8x16xf32>
    %23 = arith.mulf %20, %22 : vector<8x16xf32>
    %cst_8 = arith.constant 0.00833216123 : f32
    %24 = vector.broadcast %cst_8 : f32 to vector<8x16xf32>
    %25 = arith.addf %24, %23 : vector<8x16xf32>
    %26 = arith.mulf %20, %25 : vector<8x16xf32>
    %cst_9 = arith.constant -0.166666552 : f32
    %27 = vector.broadcast %cst_9 : f32 to vector<8x16xf32>
    %28 = arith.addf %27, %26 : vector<8x16xf32>
    %29 = arith.mulf %21, %28 : vector<8x16xf32>
    %30 = arith.addf %19, %29 : vector<8x16xf32>
    %cst_10 = arith.constant 5.000000e-01 : f32
    %31 = vector.broadcast %cst_10 : f32 to vector<8x16xf32>
    %32 = arith.mulf %31, %20 : vector<8x16xf32>
    %cst_11 = arith.constant 1.000000e+00 : f32
    %33 = vector.broadcast %cst_11 : f32 to vector<8x16xf32>
    %34 = arith.subf %33, %32 : vector<8x16xf32>
    %35 = arith.mulf %20, %20 : vector<8x16xf32>
    %cst_12 = arith.constant 2.44331568E-5 : f32
    %36 = vector.broadcast %cst_12 : f32 to vector<8x16xf32>
    %37 = arith.mulf %20, %36 : vector<8x16xf32>
    %cst_13 = arith.constant -0.00138873165 : f32
    %38 = vector.broadcast %cst_13 : f32 to vector<8x16xf32>
    %39 = arith.addf %38, %37 : vector<8x16xf32>
    %40 = arith.mulf %20, %39 : vector<8x16xf32>
    %cst_14 = arith.constant 0.0416666456 : f32
    %41 = vector.broadcast %cst_14 : f32 to vector<8x16xf32>
    %42 = arith.addf %41, %40 : vector<8x16xf32>
    %43 = arith.mulf %35, %42 : vector<8x16xf32>
    %44 = arith.addf %34, %43 : vector<8x16xf32>
    %c1_i32 = arith.constant 1 : i32
    %45 = vector.broadcast %c1_i32 : i32 to vector<8x16xi32>
    %46 = arith.andi %10, %45 : vector<8x16xi32>
    %c1_i32_15 = arith.constant 1 : i32
    %47 = vector.broadcast %c1_i32_15 : i32 to vector<8x16xi32>
    %48 = arith.cmpi eq, %46, %47 : vector<8x16xi32>
    %49 = arith.select %48, %44, %30 : vector<8x16xi1>, vector<8x16xf32>
    %50 = arith.select %48, %30, %44 : vector<8x16xi1>, vector<8x16xf32>
    %c2_i32 = arith.constant 2 : i32
    %51 = vector.broadcast %c2_i32 : i32 to vector<8x16xi32>
    %52 = arith.andi %10, %51 : vector<8x16xi32>
    %c2_i32_16 = arith.constant 2 : i32
    %53 = vector.broadcast %c2_i32_16 : i32 to vector<8x16xi32>
    %54 = arith.cmpi eq, %52, %53 : vector<8x16xi32>
    %cst_17 = arith.constant 0.000000e+00 : f32
    %55 = vector.broadcast %cst_17 : f32 to vector<8x16xf32>
    %56 = arith.subf %55, %49 : vector<8x16xf32>
    %57 = arith.select %54, %56, %49 : vector<8x16xi1>, vector<8x16xf32>
    %c1_i32_18 = arith.constant 1 : i32
    %58 = vector.broadcast %c1_i32_18 : i32 to vector<8x16xi32>
    %59 = arith.addi %10, %58 : vector<8x16xi32>
    %c2_i32_19 = arith.constant 2 : i32
    %60 = vector.broadcast %c2_i32_19 : i32 to vector<8x16xi32>
    %61 = arith.andi %59, %60 : vector<8x16xi32>
    %c2_i32_20 = arith.constant 2 : i32
    %62 = vector.broadcast %c2_i32_20 : i32 to vector<8x16xi32>
    %63 = arith.cmpi eq, %61, %62 : vector<8x16xi32>
    %cst_21 = arith.constant 0.000000e+00 : f32
    %64 = vector.broadcast %cst_21 : f32 to vector<8x16xf32>
    %65 = arith.subf %64, %50 : vector<8x16xf32>
    %66 = arith.select %63, %65, %50 : vector<8x16xi1>, vector<8x16xf32>
    %67 = tpu.concatenate %66, %57 in 1 : vector<8x16xf32>, vector<8x16xf32> -> vector<8x32xf32>
    %c0_22 = arith.constant 0 : index
    %c0_23 = arith.constant 0 : index
    %68 = vector.load %arg3[%c0_22, %c0_23] : memref<8x32xf32, #tpu.memory_space<vmem>>, vector<8x32xf32>
    tpu.vector_store %arg3[%c0_22, %c0_23], %67 {strides = array<i32>} : memref<8x32xf32, #tpu.memory_space<vmem>>, vector<8x32xf32>,
    return
  }
  func.func @transform_0(%arg0: i32) -> (i32, i32) {
    %c0_i32 = arith.constant 0 : i32
    %c0_i32_0 = arith.constant 0 : i32
    return %arg0, %c0_i32 : i32, i32
  }
  func.func @transform_1(%arg0: i32) -> (i32, i32) {
    %c0_i32 = arith.constant 0 : i32
    %c0_i32_0 = arith.constant 0 : i32
    %c0_i32_1 = arith.constant 0 : i32
    return %c0_i32, %c0_i32_0 : i32, i32
  }
  func.func @transform_2(%arg0: i32) -> (i32, i32) {
    %c0_i32 = arith.constant 0 : i32
    %c0_i32_0 = arith.constant 0 : i32
    return %arg0, %c0_i32 : i32, i32
  }
}

</mosaic_0001>

<llo_original>
// kernel: tpu_custom_call.1
$region0: #{tpu_custom_call.1}
  #allocation0 [shape = 'u32[]', space=smem, size = 0x4, offset = 0x4, fixed_abs, tag = 'smem constant byte address 0x4 - core index']
  #allocation1 [shape = 'u32[72,128]{1,0:T(1,128)}', space=vmem, size = 0x9000, scoped, tag = 'internal scratch']
  %s0 = inlined_call_operand.vmem [shape: f32[8,1], index: 0, kind: input, shape index: {}]
  %s1 = inlined_call_operand.vmem [shape: f32[1,16], index: 1, kind: input, shape index: {}]
  %s2 = inlined_call_operand.hbm [shape: f32[8,32], index: 2, kind: output, shape index: {}]
  %s3 = sld [smem:[#allocation0]]
  $region18: #{tpu_custom_call.1} parent=0
    _
  %s5 = ssub.s32 1, %s3
  %s6 = scalar_select 0, %s5, %s3
  $region1: #{tpu_custom_call.1} parent=0
    #allocation2 [shape = 'u8[4096]{0}', space=vmem, size = 0x1000, scoped, tag = 'output window, operand 0, single buffered']
    #allocation3 [shape = 's32[1]{0}', space=sflag, size = 0x4, scoped, tag = 'scoped memory for tpu_custom_call.1']
    %7 = vsyncpa [#allocation3], 0
    // Predicated region
    $region2: #{tpu_custom_call.1} parent=1 // pred_check
      _
    $region3: #{tpu_custom_call.1} parent=1 // pred_check_branch
      %9 = sbr.rel (0) target = $region5
    $region4: #{tpu_custom_call.1} parent=1 // pred_region
      _
    $region5: #{tpu_custom_call.1} parent=1 // pred_fallthru
      _
    // Predicated region
    $region6: #{tpu_custom_call.1} parent=1 // pred_check
      _
    $region7: #{tpu_custom_call.1} parent=1 // pred_check_branch
      %11 = sbr.rel (0) target = $region9
    $region8: #{tpu_custom_call.1} parent=1 // pred_region
      _
    $region9: #{tpu_custom_call.1} parent=1 // pred_fallthru
      _
    %v12 = vld [vmem:[%s0] sm:$0xff]
    %v13 = vld [vmem:[%s1] sm:$0x1]
    %15 = vset.pattern.permute.xlu0 0
    %16 = vperm.xlu0 %15, %v12
    %v17 = vpop.permute.xlu0 %16
    %v20 = vperm.slane %v13, 0
    %v22 = vmul.f32 %v17, %v20
    %v23 = vmul.f32 %v22, 0.63661975
    %v24 = vadd.f32 %v23, 0.5
    %v25 = vfloor.f32 %v24
    %v26 = vcvt.f32.s32.to.zero.pseudo %v25
    %v27 = vmul.f32 %v25, 1.5703125
    %v28 = vsub.f32 %v22, %v27
    %v29 = vmul.f32 %v25, 0.0004837513
    %v30 = vsub.f32 %v28, %v29
    %v31 = vmul.f32 %v25, 7.54979e-08
    %v32 = vsub.f32 %v30, %v31
    %v33 = vmul.f32 %v32, %v32
    %v34 = vmul.f32 %v32, %v33
    %v35 = vmul.f32 %v33, -0.00019515296
    %v36 = vadd.f32 %v35, 0.008332161
    %v37 = vmul.f32 %v33, %v36
    %v38 = vadd.f32 %v37, -0.16666655
    %v39 = vmul.f32 %v34, %v38
    %v40 = vadd.f32 %v32, %v39
    %v41 = vmul.f32 %v33, 0.5
    %v42 = vsub.f32 1.0, %v41
    %v43 = vmul.f32 %v33, %v33
    %v44 = vmul.f32 %v33, 2.4433157e-05
    %v45 = vadd.f32 %v44, -0.0013887316
    %v46 = vmul.f32 %v33, %v45
    %v47 = vadd.f32 %v46, 0.041666646
    %v48 = vmul.f32 %v43, %v47
    %v49 = vadd.f32 %v42, %v48
    %v50 = vand.u32 %v26, 1
    %vm51 = vcmp.eq.s32.totalorder %v50, 1
    %v52 = vsel %vm51, %v49, %v40
    %v53 = vsel %vm51, %v40, %v49
    %v54 = vand.u32 %v26, 2
    %vm55 = vcmp.eq.s32.totalorder %v54, 2
    %v56 = vsub.f32 0.0, %v52
    %v57 = vsel %vm55, %v56, %v52
    %v58 = vadd.s32 %v26, 1
    %v59 = vand.u32 %v58, 2
    %vm60 = vcmp.eq.s32.totalorder %v59, 2
    %v61 = vsub.f32 0.0, %v53
    %v62 = vsel %vm60, %v61, %v53
    %64 = vrot.lane.b32.xlu0 %v57, 16
    %v65 = vpop.permute.xlu0 %64
    %vm67 = vcmask 130048
    %v68 = vsel %vm67, %v62, %v65
    %vm69 = vcmask 261120
    %70 = vst.msk [vmem:[#allocation2] sm:$0xff] %vm69, %v68
    // Predicated region
    $region10: #{tpu_custom_call.1} parent=1 // pred_check
      _
    $region11: #{tpu_custom_call.1} parent=1 // pred_check_branch
      %72 = sbr.rel (0) target = $region13
    $region12: #{tpu_custom_call.1} parent=1 // pred_region
      %74 = vsyncadd [#allocation3], 0
      %s76 = sshll.u32 [#allocation2], 4
      %s77 = int_to_ptr.vmem [resolvable:$true] %s76
      %s78 = sshll.u32 %s2, 4
      %s79 = int_to_ptr.hbm [resolvable:$true] %s78
      %81 = dma.vmem_to_hbm [thread:$0]  %s77, 128, %s79, [#allocation3]
    $region13: #{tpu_custom_call.1} parent=1 // pred_fallthru
      _
    // Predicated region
    $region14: #{tpu_custom_call.1} parent=1 // pred_check
      _
    $region15: #{tpu_custom_call.1} parent=1 // pred_check_branch
      %83 = sbr.rel (0) target = $region17
    $region16: #{tpu_custom_call.1} parent=1 // pred_region
      %85 = dma.done [#allocation3], 128
    $region17: #{tpu_custom_call.1} parent=1 // pred_fallthru
      _
    %86 = vsyncpa [#allocation3], 1

</llo_original>
